<compile_context>
chip_gen: v5e
topology: v5e:2x2
jax: 0.10.0
libtpu: 0.0.40
codegen_flags: <defaults>
</compile_context>

<pallas_src>
import functools

import jax
import jax.numpy as jnp
from jax.experimental import pallas as pl
from jax.experimental.pallas import tpu as pltpu


_FUSED_SLAB_BYTES = 4 * 1024 * 1024      # target size of one (N, c_tile, HW) HBM block
_TWO_PASS_BLOCK_BYTES = 8 * 1024 * 1024  # target size of one (c_tile, hw_tile) HBM block
_VMEM_LIMIT_BYTES = 48 * 1024 * 1024     # >> our usage, < v7x 64 MiB physical VMEM


def _round_up(x, m):
    return ((x + m - 1) // m) * m


def _cdiv(a, b):
    return (a + b - 1) // b


def _sublane_base(dtype):
    # 8 sublanes of 32-bit; sub-32-bit dtypes pack along sublanes (16 for bf16, 32 for i8).
    return max(8, 32 // jnp.dtype(dtype).itemsize)


def _choose_channel_tile(C, base, max_channels, split_for_megacore):
    """Multiple-of-`base` channel tile <= max_channels; optionally capped near C/2
    so the parallel channel axis has >= 2 blocks (v7x megacore)."""
    if C <= base:
        return C
    ct = max(base, (max_channels // base) * base)
    ct = min(ct, _round_up(C, base))
    if split_for_megacore and C >= 2 * base:
        ct = min(ct, _round_up(_cdiv(C, 2), base))
    return max(ct, base)


# ----------------------------------------------------------------------------
# Kernels
# ----------------------------------------------------------------------------

def _fused_train_kernel(x_ref, w_ref, b_ref, rm_ref, rv_ref,
                        y_ref, new_rm_ref, new_rv_ref,
                        *, m_count, eps, momentum, unbias):
    """Whole (N, c_tile, HW) channel slab resident in VMEM: stats + normalize fused."""
    x = x_ref[...].astype(jnp.float32)                          # (N, ct, HW)
    inv_m = 1.0 / m_count
    # Per-channel mean: reduce lanes first (XLU), then the tiny leading N axis.
    mean = jnp.sum(jnp.sum(x, axis=2, keepdims=True), axis=0) * inv_m      # (ct, 1)
    d = x - mean                                                 # centered; reused below
    var = jnp.sum(jnp.sum(d * d, axis=2, keepdims=True), axis=0) * inv_m   # (ct, 1)
    inv_std = jax.lax.rsqrt(var + eps)
    scale = w_ref[...] * inv_std                                 # (ct, 1)
    y_ref[...] = (d * scale + b_ref[...]).astype(y_ref.dtype)
    new_rm_ref[...] = (momentum * mean
                       + (1.0 - momentum) * rm_ref[...]).astype(new_rm_ref.dtype)
    new_rv_ref[...] = (momentum * unbias * var
                       + (1.0 - momentum) * rv_ref[...]).astype(new_rv_ref.dtype)


def _stats_kernel(x_ref, sum_ref, sumsq_ref, *, hw_total, hw_tile, mask_tail):
    """Tiled per-channel sum / sum-of-squares; grid = (c_tiles, N, hw_tiles)."""
    n = pl.program_id(1)
    t = pl.program_id(2)

    @pl.when((n == 0) & (t == 0))
    def _():
        sum_ref[...] = jnp.zeros_like(sum_ref)
        sumsq_ref[...] = jnp.zeros_like(sumsq_ref)

    x = x_ref[...].astype(jnp.float32)                           # (ct, hw_tile)
    if mask_tail:
        col = jax.lax.broadcasted_iota(jnp.int32, x.shape, 1) + t * hw_tile
        x = jnp.where(col < hw_total, x, 0.0)
    sum_ref[...] += jnp.sum(x, axis=1, keepdims=True)
    # TODO(synk): E[x^2]-mean^2 in this fallback can cancel for large-|mean|
    # channels; a shifted sum-of-squares would need an extra sweep here.
    sumsq_ref[...] += jnp.sum(x * x, axis=1, keepdims=True)


def _normalize_kernel(x_ref, a_ref, v_ref, w_ref, b_ref, y_ref, *, eps, m_count):
    """Normalize one (c_tile, hw_tile) tile; scale/shift computed in-kernel.

    Training fallback: a=sum, v=sumsq (m_count = N*H*W).  Eval: a=mean, v=var."""
    if m_count is None:
        mean = a_ref[...]
        var = v_ref[...]
    else:
        mean = a_ref[...] * (1.0 / m_count)
        var = jnp.maximum(v_ref[...] * (1.0 / m_count) - mean * mean, 0.0)
    scale = w_ref[...] * jax.lax.rsqrt(var + eps)                # (ct, 1)
    shift = b_ref[...] - mean * scale
    x = x_ref[...].astype(jnp.float32)                           # (ct, hw_tile)
    y_ref[...] = (x * scale + shift).astype(y_ref.dtype)


# ----------------------------------------------------------------------------
# Wrapper
# ----------------------------------------------------------------------------

def my_batchnorm2d(x, weight, bias, running_mean, running_var,
                   eps=1e-5, momentum=0.1, training=True, force_two_pass=False):
    """Forward matching torch MyBatchNorm2d.

    x: (N, C, H, W).  Returns (y, new_running_mean, new_running_var)."""
    N, C, H, W = x.shape
    HW = H * W
    M = N * HW
    itemsize = jnp.dtype(x.dtype).itemsize
    base = _sublane_base(x.dtype)

    x3 = x.reshape(N, C, HW)                                     # free reshape

    w2 = weight.astype(jnp.float32).reshape(C, 1)
    b2 = bias.astype(jnp.float32).reshape(C, 1)
    rm2 = running_mean.astype(jnp.float32).reshape(C, 1)
    rv2 = running_var.astype(jnp.float32).reshape(C, 1)

    unbias = float(M) / float(M - 1) if M > 1 else 1.0

    per_channel_bytes = N * HW * itemsize
    fused_ok = (training and not force_two_pass
                and min(C, base) * per_channel_bytes <= _FUSED_SLAB_BYTES)

    if fused_ok:
        # ---- fused training path: grid over channel tiles only --------------
        c_tile = _choose_channel_tile(
            C, base,
            max_channels=max(1, _FUSED_SLAB_BYTES // per_channel_bytes),
            split_for_megacore=True)
        grid = (_cdiv(C, c_tile),)

        x_spec = pl.BlockSpec((N, c_tile, HW), lambda ci: (0, ci, 0))
        cvec_spec = pl.BlockSpec((c_tile, 1), lambda ci: (ci, 0))

        kernel = functools.partial(
            _fused_train_kernel, m_count=float(M), eps=float(eps),
            momentum=float(momentum), unbias=unbias)

        y3, new_rm, new_rv = pl.pallas_call(
            kernel,
            out_shape=(jax.ShapeDtypeStruct((N, C, HW), x.dtype),
                       jax.ShapeDtypeStruct((C, 1), running_mean.dtype),
                       jax.ShapeDtypeStruct((C, 1), running_var.dtype)),
            grid=grid,
            in_specs=[x_spec, cvec_spec, cvec_spec, cvec_spec, cvec_spec],
            out_specs=(x_spec, cvec_spec, cvec_spec),
            compiler_params=pltpu.CompilerParams(
                dimension_semantics=("parallel",),
                vmem_limit_bytes=_VMEM_LIMIT_BYTES),
        )(x3, w2, b2, rm2, rv2)

        return (y3.reshape(N, C, H, W),
                new_rm.reshape(C), new_rv.reshape(C))

    # ---- tiled path: grid = (c_tiles, N, hw_tiles) ---------------------------
    c_tile = _choose_channel_tile(
        C, base, max_channels=min(_round_up(C, base), 512),
        split_for_megacore=True)
    if HW >= 128:
        hw_cap = max(128, (_TWO_PASS_BLOCK_BYTES // (c_tile * itemsize)) // 128 * 128)
        hw_tile = min(hw_cap, _round_up(HW, 128))
    else:
        # TODO(synk): HW < 128 under-fills lanes (masked stores); folding N into
        # the lane dimension would fix this regime for tiny feature maps.
        hw_tile = HW
    mask_tail = (HW % hw_tile) != 0

    grid = (_cdiv(C, c_tile), N, _cdiv(HW, hw_tile))
    x_spec = pl.BlockSpec((None, c_tile, hw_tile), lambda ci, n, t: (n, ci, t))
    cvec_spec = pl.BlockSpec((c_tile, 1), lambda ci, n, t: (ci, 0))

    if training:
        stats_kernel = functools.partial(
            _stats_kernel, hw_total=HW, hw_tile=hw_tile, mask_tail=mask_tail)
        sum_c, sumsq_c = pl.pallas_call(
            stats_kernel,
            out_shape=(jax.ShapeDtypeStruct((C, 1), jnp.float32),
                       jax.ShapeDtypeStruct((C, 1), jnp.float32)),
            grid=grid,
            in_specs=[x_spec],
            out_specs=(cvec_spec, cvec_spec),
            compiler_params=pltpu.CompilerParams(
                dimension_semantics=("parallel", "arbitrary", "arbitrary"),
                vmem_limit_bytes=_VMEM_LIMIT_BYTES),
        )(x3)

        a_c, v_c, m_count = sum_c, sumsq_c, float(M)

        # Running-stat update: tiny (C,) XLA ops, off the per-element path.
        mean = sum_c.reshape(C) / M
        var = jnp.maximum(sumsq_c.reshape(C) / M - mean * mean, 0.0)
        new_rm = (momentum * mean
                  + (1.0 - momentum) * running_mean).astype(running_mean.dtype)
        new_rv = (momentum * var * unbias
                  + (1.0 - momentum) * running_var).astype(running_var.dtype)
    else:
        a_c, v_c, m_count = rm2, rv2, None
        new_rm, new_rv = running_mean, running_var

    norm_kernel = functools.partial(_normalize_kernel, eps=float(eps), m_count=m_count)
    y3 = pl.pallas_call(
        norm_kernel,
        out_shape=jax.ShapeDtypeStruct((N, C, HW), x.dtype),
        grid=grid,
        in_specs=[x_spec, cvec_spec, cvec_spec, cvec_spec, cvec_spec],
        out_specs=x_spec,
        compiler_params=pltpu.CompilerParams(
            dimension_semantics=("parallel", "parallel", "parallel"),
            vmem_limit_bytes=_VMEM_LIMIT_BYTES),
    )(x3, a_c, v_c, w2, b2)

    return y3.reshape(N, C, H, W), new_rm, new_rv


# ----------------------------------------------------------------------------
# Self-test
# ----------------------------------------------------------------------------

def _reference(x, weight, bias, mean, var, eps):
    mean = mean.reshape(1, -1, 1, 1)
    var = var.reshape(1, -1, 1, 1)
    xn = (x - mean) / jnp.sqrt(var + eps)
    return xn * weight.reshape(1, -1, 1, 1) + bias.reshape(1, -1, 1, 1)


if __name__ == "__main__":
    key = jax.random.PRNGKey(0)
    N, C, H, W = 2, 4, 16, 16
    eps, momentum = 1e-5, 0.1

    x = jax.random.normal(key, (N, C, H, W), dtype=jnp.float32) * 2.0 + 0.5

    # Module parameters/buffers (init is ones/zeros; use non-trivial "trained"
    # weight/bias values for a stronger forward check).
    weight = 1.0 + 0.1 * jnp.arange(C, dtype=jnp.float32)
    bias = 0.05 * jnp.arange(C, dtype=jnp.float32)
    running_mean = jnp.zeros((C,), dtype=jnp.float32)
    running_var = jnp.ones((C,), dtype=jnp.float32)

    M = N * H * W
    mean_ref = x.mean(axis=(0, 2, 3))
    var_ref = x.var(axis=(0, 2, 3))
    y_ref = _reference(x, weight, bias, mean_ref, var_ref, eps)
    rm_ref = momentum * mean_ref + (1 - momentum) * running_mean
    rv_ref = momentum * var_ref * (M / (M - 1)) + (1 - momentum) * running_var

    # Training, fused path.
    y, rm, rv = my_batchnorm2d(x, weight, bias, running_mean, running_var,
                               eps=eps, momentum=momentum, training=True)
    jax.block_until_ready((y, rm, rv))
    assert jnp.allclose(y, y_ref, atol=1e-3, rtol=1e-3), "fused train output mismatch"
    assert jnp.allclose(rm, rm_ref, atol=1e-4, rtol=1e-4), "running_mean mismatch"
    assert jnp.allclose(rv, rv_ref, atol=1e-4, rtol=1e-4), "running_var mismatch"

    # Training, two-pass fallback path (forced) - same semantics.
    y2, rm2_, rv2_ = my_batchnorm2d(x, weight, bias, running_mean, running_var,
                                    eps=eps, momentum=momentum, training=True,
                                    force_two_pass=True)
    jax.block_until_ready((y2, rm2_, rv2_))
    assert jnp.allclose(y2, y_ref, atol=1e-3, rtol=1e-3), "two-pass train output mismatch"
    assert jnp.allclose(rm2_, rm_ref, atol=1e-4, rtol=1e-4), "two-pass running_mean mismatch"
    assert jnp.allclose(rv2_, rv_ref, atol=1e-4, rtol=1e-4), "two-pass running_var mismatch"

    # Eval mode: normalize with running stats (mean=0, var=1 here).
    y_eval, rm_e, rv_e = my_batchnorm2d(x, weight, bias, running_mean, running_var,
                                        eps=eps, momentum=momentum, training=False)
    jax.block_until_ready(y_eval)
    y_eval_ref = _reference(x, weight, bias, running_mean, running_var, eps)
    assert jnp.allclose(y_eval, y_eval_ref, atol=1e-4, rtol=1e-4), "eval output mismatch"
    assert jnp.allclose(rm_e, running_mean) and jnp.allclose(rv_e, running_var)

    print("KERNEL_OK")
</pallas_src>

<mosaic_0001>
module attributes {stable_mosaic.version = 11 : i64} {
  func.func @_fused_train_kernel(%arg0: i32, %arg1: memref<2x4x256xf32, #tpu.memory_space<vmem>>, %arg2: memref<4x1xf32, #tpu.memory_space<vmem>>, %arg3: memref<4x1xf32, #tpu.memory_space<vmem>>, %arg4: memref<4x1xf32, #tpu.memory_space<vmem>>, %arg5: memref<4x1xf32, #tpu.memory_space<vmem>>, %arg6: memref<2x4x256xf32, #tpu.memory_space<vmem>>, %arg7: memref<4x1xf32, #tpu.memory_space<vmem>>, %arg8: memref<4x1xf32, #tpu.memory_space<vmem>>) attributes {dimension_semantics = [#tpu.dimension_semantics<parallel>], iteration_bounds = array<i64: 1>, scalar_prefetch = 0 : i64, scratch_operands = 0 : i64, tpu.core_type = #tpu.core_type<tc>, window_params = [{transform_indices = @transform_0, window_bounds = array<i64: 2, 4, 256>}, {transform_indices = @transform_1, window_bounds = array<i64: 4, 1>}, {transform_indices = @transform_2, window_bounds = array<i64: 4, 1>}, {transform_indices = @transform_3, window_bounds = array<i64: 4, 1>}, {transform_indices = @transform_4, window_bounds = array<i64: 4, 1>}, {transform_indices = @transform_5, window_bounds = array<i64: 2, 4, 256>}, {transform_indices = @transform_6, window_bounds = array<i64: 4, 1>}, {transform_indices = @transform_7, window_bounds = array<i64: 4, 1>}]} {
    %c0 = arith.constant 0 : index
    %c0_0 = arith.constant 0 : index
    %c0_1 = arith.constant 0 : index
    %0 = vector.load %arg1[%c0, %c0_0, %c0_1] : memref<2x4x256xf32, #tpu.memory_space<vmem>>, vector<2x4x256xf32>
    %cst = arith.constant dense<0.000000e+00> : vector<2x4xf32>
    %1 = vector.multi_reduction <add>, %0, %cst [2] : vector<2x4x256xf32> to vector<2x4xf32>
    %2 = vector.shape_cast %1 : vector<2x4xf32> to vector<2x4x1xf32>
    %cst_2 = arith.constant dense<0.000000e+00> : vector<4x1xf32>
    %3 = vector.multi_reduction <add>, %2, %cst_2 [0] : vector<2x4x1xf32> to vector<4x1xf32>
    %cst_3 = arith.constant 0.001953125 : f32
    %4 = vector.broadcast %cst_3 : f32 to vector<4x1xf32>
    %5 = arith.mulf %3, %4 : vector<4x1xf32>
    %6 = vector.shape_cast %5 : vector<4x1xf32> to vector<1x4x1xf32>
    %7 = vector.broadcast %6 : vector<1x4x1xf32> to vector<2x4x256xf32>
    %8 = arith.subf %0, %7 : vector<2x4x256xf32>
    %9 = arith.mulf %8, %8 : vector<2x4x256xf32>
    %cst_4 = arith.constant dense<0.000000e+00> : vector<2x4xf32>
    %10 = vector.multi_reduction <add>, %9, %cst_4 [2] : vector<2x4x256xf32> to vector<2x4xf32>
    %11 = vector.shape_cast %10 : vector<2x4xf32> to vector<2x4x1xf32>
    %cst_5 = arith.constant dense<0.000000e+00> : vector<4x1xf32>
    %12 = vector.multi_reduction <add>, %11, %cst_5 [0] : vector<2x4x1xf32> to vector<4x1xf32>
    %cst_6 = arith.constant 0.001953125 : f32
    %13 = vector.broadcast %cst_6 : f32 to vector<4x1xf32>
    %14 = arith.mulf %12, %13 : vector<4x1xf32>
    %cst_7 = arith.constant 9.99999974E-6 : f32
    %15 = vector.broadcast %cst_7 : f32 to vector<4x1xf32>
    %16 = arith.addf %14, %15 : vector<4x1xf32>
    %17 = math.rsqrt %16 : vector<4x1xf32>
    %c0_8 = arith.constant 0 : index
    %c0_9 = arith.constant 0 : index
    %18 = vector.load %arg2[%c0_8, %c0_9] : memref<4x1xf32, #tpu.memory_space<vmem>>, vector<4x1xf32>
    %19 = arith.mulf %18, %17 : vector<4x1xf32>
    %20 = vector.shape_cast %19 : vector<4x1xf32> to vector<1x4x1xf32>
    %21 = vector.broadcast %20 : vector<1x4x1xf32> to vector<2x4x256xf32>
    %22 = arith.mulf %8, %21 : vector<2x4x256xf32>
    %c0_10 = arith.constant 0 : index
    %c0_11 = arith.constant 0 : index
    %23 = vector.load %arg3[%c0_10, %c0_11] : memref<4x1xf32, #tpu.memory_space<vmem>>, vector<4x1xf32>
    %24 = vector.shape_cast %23 : vector<4x1xf32> to vector<1x4x1xf32>
    %25 = vector.broadcast %24 : vector<1x4x1xf32> to vector<2x4x256xf32>
    %26 = arith.addf %22, %25 : vector<2x4x256xf32>
    %c0_12 = arith.constant 0 : index
    %c0_13 = arith.constant 0 : index
    %c0_14 = arith.constant 0 : index
    %27 = vector.load %arg6[%c0_12, %c0_13, %c0_14] : memref<2x4x256xf32, #tpu.memory_space<vmem>>, vector<2x4x256xf32>
    tpu.vector_store %arg6[%c0_12, %c0_13, %c0_14], %26 {strides = array<i32>} : memref<2x4x256xf32, #tpu.memory_space<vmem>>, vector<2x4x256xf32>,
    %cst_15 = arith.constant 1.000000e-01 : f32
    %28 = vector.broadcast %cst_15 : f32 to vector<4x1xf32>
    %29 = arith.mulf %28, %5 : vector<4x1xf32>
    %c0_16 = arith.constant 0 : index
    %c0_17 = arith.constant 0 : index
    %30 = vector.load %arg4[%c0_16, %c0_17] : memref<4x1xf32, #tpu.memory_space<vmem>>, vector<4x1xf32>
    %cst_18 = arith.constant 0.899999976 : f32
    %31 = vector.broadcast %cst_18 : f32 to vector<4x1xf32>
    %32 = arith.mulf %31, %30 : vector<4x1xf32>
    %33 = arith.addf %29, %32 : vector<4x1xf32>
    %c0_19 = arith.constant 0 : index
    %c0_20 = arith.constant 0 : index
    %34 = vector.load %arg7[%c0_19, %c0_20] : memref<4x1xf32, #tpu.memory_space<vmem>>, vector<4x1xf32>
    tpu.vector_store %arg7[%c0_19, %c0_20], %33 {strides = array<i32>} : memref<4x1xf32, #tpu.memory_space<vmem>>, vector<4x1xf32>,
    %cst_21 = arith.constant 0.100195698 : f32
    %35 = vector.broadcast %cst_21 : f32 to vector<4x1xf32>
    %36 = arith.mulf %35, %14 : vector<4x1xf32>
    %c0_22 = arith.constant 0 : index
    %c0_23 = arith.constant 0 : index
    %37 = vector.load %arg5[%c0_22, %c0_23] : memref<4x1xf32, #tpu.memory_space<vmem>>, vector<4x1xf32>
    %cst_24 = arith.constant 0.899999976 : f32
    %38 = vector.broadcast %cst_24 : f32 to vector<4x1xf32>
    %39 = arith.mulf %38, %37 : vector<4x1xf32>
    %40 = arith.addf %36, %39 : vector<4x1xf32>
    %c0_25 = arith.constant 0 : index
    %c0_26 = arith.constant 0 : index
    %41 = vector.load %arg8[%c0_25, %c0_26] : memref<4x1xf32, #tpu.memory_space<vmem>>, vector<4x1xf32>
    tpu.vector_store %arg8[%c0_25, %c0_26], %40 {strides = array<i32>} : memref<4x1xf32, #tpu.memory_space<vmem>>, vector<4x1xf32>,
    return
  }
  func.func @transform_0(%arg0: i32) -> (i32, i32, i32) {
    %c0_i32 = arith.constant 0 : i32
    %c0_i32_0 = arith.constant 0 : i32
    %c0_i32_1 = arith.constant 0 : i32
    return %c0_i32, %arg0, %c0_i32_0 : i32, i32, i32
  }
  func.func @transform_1(%arg0: i32) -> (i32, i32) {
    %c0_i32 = arith.constant 0 : i32
    %c0_i32_0 = arith.constant 0 : i32
    return %arg0, %c0_i32 : i32, i32
  }
  func.func @transform_2(%arg0: i32) -> (i32, i32) {
    %c0_i32 = arith.constant 0 : i32
    %c0_i32_0 = arith.constant 0 : i32
    return %arg0, %c0_i32 : i32, i32
  }
  func.func @transform_3(%arg0: i32) -> (i32, i32) {
    %c0_i32 = arith.constant 0 : i32
    %c0_i32_0 = arith.constant 0 : i32
    return %arg0, %c0_i32 : i32, i32
  }
  func.func @transform_4(%arg0: i32) -> (i32, i32) {
    %c0_i32 = arith.constant 0 : i32
    %c0_i32_0 = arith.constant 0 : i32
    return %arg0, %c0_i32 : i32, i32
  }
  func.func @transform_5(%arg0: i32) -> (i32, i32, i32) {
    %c0_i32 = arith.constant 0 : i32
    %c0_i32_0 = arith.constant 0 : i32
    %c0_i32_1 = arith.constant 0 : i32
    return %c0_i32, %arg0, %c0_i32_0 : i32, i32, i32
  }
  func.func @transform_6(%arg0: i32) -> (i32, i32) {
    %c0_i32 = arith.constant 0 : i32
    %c0_i32_0 = arith.constant 0 : i32
    return %arg0, %c0_i32 : i32, i32
  }
  func.func @transform_7(%arg0: i32) -> (i32, i32) {
    %c0_i32 = arith.constant 0 : i32
    %c0_i32_0 = arith.constant 0 : i32
    return %arg0, %c0_i32 : i32, i32
  }
}

</mosaic_0001>

<llo_original>
// kernel: tpu_custom_call.1
$region0: #{tpu_custom_call.1}
  #allocation0 [shape = 'u32[]', space=smem, size = 0x4, offset = 0x4, fixed_abs, tag = 'smem constant byte address 0x4 - core index']
  #allocation1 [shape = 'u32[72,128]{1,0:T(1,128)}', space=vmem, size = 0x9000, scoped, tag = 'internal scratch']
  %s0 = inlined_call_operand.hbm [shape: f32[2,4,256], index: 0, kind: input, shape index: {}]
  %s1 = inlined_call_operand.vmem [shape: f32[4,1], index: 1, kind: input, shape index: {}]
  %s2 = inlined_call_operand.vmem [shape: f32[4,1], index: 2, kind: input, shape index: {}]
  %s3 = inlined_call_operand.vmem [shape: f32[4,1], index: 3, kind: input, shape index: {}]
  %s4 = inlined_call_operand.vmem [shape: f32[4,1], index: 4, kind: input, shape index: {}]
  %s5 = inlined_call_operand.hbm [shape: f32[2,4,256], index: 5, kind: output, shape index: {0}]
  %s6 = inlined_call_operand.vmem [shape: f32[4,1], index: 6, kind: output, shape index: {1}]
  %s7 = inlined_call_operand.vmem [shape: f32[4,1], index: 7, kind: output, shape index: {2}]
  %8 = xla_tuple %s5, %s6, %s7
  %s9 = sld [smem:[#allocation0]]
  $region50: #{tpu_custom_call.1} parent=0
    _
  %s11 = ssub.s32 1, %s9
  %s12 = scalar_select 0, %s11, %s9
  $region1: #{tpu_custom_call.1} parent=0
    #allocation2 [shape = 'u8[8192]{0}', space=vmem, size = 0x2000, scoped, tag = 'input window, operand 0, single buffered']
    #allocation3 [shape = 's32[1]{0}', space=sflag, size = 0x4, scoped, tag = 'scoped memory for tpu_custom_call.1']
    #allocation4 [shape = 's32[1]{0}', space=sflag, size = 0x4, scoped, tag = 'scoped memory for tpu_custom_call.1']
    #allocation5 [shape = 'u8[8192]{0}', space=vmem, size = 0x2000, scoped, tag = 'output window, operand 0, single buffered']
    %13 = vsyncpa [#allocation3], 0
    %14 = vsyncpa [#allocation4], 0
    // Predicated region
    $region2: #{tpu_custom_call.1} parent=1 // pred_check
      _
    $region3: #{tpu_custom_call.1} parent=1 // pred_check_branch
      %16 = sbr.rel (0) target = $region5
    $region4: #{tpu_custom_call.1} parent=1 // pred_region
      %18 = vsyncadd [#allocation3], 0
      %s19 = sshll.u32 %s0, 4
      %s20 = int_to_ptr.hbm [resolvable:$true] %s19
      %s21 = sshll.u32 [#allocation2], 4
      %s22 = int_to_ptr.vmem [resolvable:$true] %s21
      %27 = dma.hbm_to_vmem [thread:$0]  %s20, 256, %s22, [#allocation3], 128, 128, 8
    $region5: #{tpu_custom_call.1} parent=1 // pred_fallthru
      _
    // Predicated region
    $region6: #{tpu_custom_call.1} parent=1 // pred_check
      _
    $region7: #{tpu_custom_call.1} parent=1 // pred_check_branch
      %29 = sbr.rel (0) target = $region9
    $region8: #{tpu_custom_call.1} parent=1 // pred_region
      _
    $region9: #{tpu_custom_call.1} parent=1 // pred_fallthru
      _
    // Predicated region
    $region10: #{tpu_custom_call.1} parent=1 // pred_check
      _
    $region11: #{tpu_custom_call.1} parent=1 // pred_check_branch
      %31 = sbr.rel (0) target = $region13
    $region12: #{tpu_custom_call.1} parent=1 // pred_region
      _
    $region13: #{tpu_custom_call.1} parent=1 // pred_fallthru
      _
    // Predicated region
    $region14: #{tpu_custom_call.1} parent=1 // pred_check
      _
    $region15: #{tpu_custom_call.1} parent=1 // pred_check_branch
      %33 = sbr.rel (0) target = $region17
    $region16: #{tpu_custom_call.1} parent=1 // pred_region
      _
    $region17: #{tpu_custom_call.1} parent=1 // pred_fallthru
      _
    // Predicated region
    $region18: #{tpu_custom_call.1} parent=1 // pred_check
      _
    $region19: #{tpu_custom_call.1} parent=1 // pred_check_branch
      %35 = sbr.rel (0) target = $region21
    $region20: #{tpu_custom_call.1} parent=1 // pred_region
      _
    $region21: #{tpu_custom_call.1} parent=1 // pred_fallthru
      _
    // Predicated region
    $region22: #{tpu_custom_call.1} parent=1 // pred_check
      _
    $region23: #{tpu_custom_call.1} parent=1 // pred_check_branch
      %37 = sbr.rel (0) target = $region25
    $region24: #{tpu_custom_call.1} parent=1 // pred_region
      %39 = dma.done [#allocation3], 256
    $region25: #{tpu_custom_call.1} parent=1 // pred_fallthru
      _
    %v40 = vld [vmem:[#allocation2] sm:$0xff]
    %v41 = vld [vmem:[#allocation2 + $0x8] sm:$0xff]
    %44 = vst [vmem:[#allocation1] ss:$2 sm:$0xff] %v40
    %v45 = vld.sshfl [vmem:[#allocation1] sm:$0xff pattern:$0x75316420]
    %v46 = vld.sshfl [vmem:[#allocation1 + $0x8] sm:$0xff pattern:$0x75316420]
    %s47 = scalar_lea.vmem [#allocation1], 16
    %48 = vst [vmem:[%s47] ss:$2 sm:$0xff] %v41
    %v49 = vld.sshfl [vmem:[#allocation1 + $0x10] sm:$0xff pattern:$0x75316420]
    %v50 = vld.sshfl [vmem:[#allocation1 + $0x18] sm:$0xff pattern:$0x75316420]
    %vm55 = vcmask 1043456
    %v56 = vsel %vm55, %v45, 0.0
    %v57 = vsel %vm55, %v46, 0.0
    %v58 = vadd.f32 %v56, %v57
    %59 = vadd.xlane.f32.xlu0 %v58
    %v60 = vpop.xlane.xlu0 %59
    %v61 = vsel %vm55, %v49, 0.0
    %v62 = vsel %vm55, %v50, 0.0
    %v63 = vadd.f32 %v61, %v62
    %64 = vadd.xlane.f32.xlu0 %v63
    %v65 = vpop.xlane.xlu0 %64
    %v66 = vsel %vm55, %v60, 0.0
    %v67 = vsel %vm55, %v65, 0.0
    %v68 = vadd.f32 %v66, %v67
    %v69 = vmul.f32 %v68, 0.001953125
    %v72 = vunpack.c.l.s4 839922192
    %v73 = vunpack.c.0.s8 %v72
    %v74 = vperm.slane %v69, %v73
    %v76 = vsub.f32 %v40, %v74
    %v77 = vsub.f32 %v41, %v74
    %v78 = vmul.f32 %v76, %v76
    %v79 = vmul.f32 %v77, %v77
    %82 = vst [vmem:[#allocation1] ss:$2 sm:$0xff] %v78
    %v83 = vld.sshfl [vmem:[#allocation1] sm:$0xff pattern:$0x75316420]
    %v84 = vld.sshfl [vmem:[#allocation1 + $0x8] sm:$0xff pattern:$0x75316420]
    %s85 = scalar_lea.vmem [#allocation1], 16
    %86 = vst [vmem:[%s85] ss:$2 sm:$0xff] %v79
    %v87 = vld.sshfl [vmem:[#allocation1 + $0x10] sm:$0xff pattern:$0x75316420]
    %v88 = vld.sshfl [vmem:[#allocation1 + $0x18] sm:$0xff pattern:$0x75316420]
    %v93 = vsel %vm55, %v83, 0.0
    %v94 = vsel %vm55, %v84, 0.0
    %v95 = vadd.f32 %v93, %v94
    %96 = vadd.xlane.f32.xlu0 %v95
    %v97 = vpop.xlane.xlu0 %96
    %v98 = vsel %vm55, %v87, 0.0
    %v99 = vsel %vm55, %v88, 0.0
    %v100 = vadd.f32 %v98, %v99
    %101 = vadd.xlane.f32.xlu0 %v100
    %v102 = vpop.xlane.xlu0 %101
    %v103 = vsel %vm55, %v97, 0.0
    %v104 = vsel %vm55, %v102, 0.0
    %v105 = vadd.f32 %v103, %v104
    %v106 = vmul.f32 %v105, 0.001953125
    %v107 = vadd.f32 %v106, 1e-05
    %v108 = vrsqrt.pop %v107
    %v109 = vmul.f32 %v108, %v107
    %v110 = vmul.f32 %v109, %v108
    %v111 = vmul.f32 0.5, %v110
    %v112 = vsub.f32 1.5, %v111
    %v113 = vmul.f32 %v108, %v112
    %vm114 = vweird.f32 %v107
    %vm115 = vweird.f32 %v108
    %vm116 = vmor %vm114, %vm115
    %v117 = vsel %vm116, %v108, %v113
    %v118 = vld [vmem:[%s1] sm:$0xf]
    %v119 = vmul.f32 %v118, %v117
    %121 = vset.pattern.permute.xlu0 0
    %122 = vperm.xlu0 %121, %v119
    %v123 = vpop.permute.xlu0 %122
    %v125 = vunpack.c.l.s4 839922192
    %v126 = vunpack.c.0.s8 %v125
    %v127 = vperm.slane %v123, %v126
    %v129 = vmul.f32 %v76, %v127
    %v130 = vmul.f32 %v77, %v127
    %v131 = vld [vmem:[%s2] sm:$0xf]
    %133 = vset.pattern.permute.xlu0 0
    %134 = vperm.xlu0 %133, %v131
    %v135 = vpop.permute.xlu0 %134
    %v137 = vunpack.c.l.s4 839922192
    %v138 = vunpack.c.0.s8 %v137
    %v139 = vperm.slane %v135, %v138
    %v141 = vadd.f32 %v129, %v139
    %v142 = vadd.f32 %v130, %v139
    %143 = vst [vmem:[#allocation5] sm:$0xff] %v141
    %144 = vst [vmem:[#allocation5 + $0x8] sm:$0xff] %v142
    %v145 = vmul.f32 %v69, 0.1
    %v146 = vld [vmem:[%s3] sm:$0xf]
    %v147 = vmul.f32 %v146, 0.9
    %v148 = vadd.f32 %v145, %v147
    %vm149 = vcmask 3072
    %150 = vst.msk [vmem:[%s6] sm:$0xf] %vm149, %v148
    %v151 = vmul.f32 %v106, 0.1001957
    %v152 = vld [vmem:[%s4] sm:$0xf]
    %v153 = vmul.f32 %v152, 0.9
    %v154 = vadd.f32 %v151, %v153
    %155 = vst.msk [vmem:[%s7] sm:$0xf] %vm149, %v154
    // Predicated region
    $region26: #{tpu_custom_call.1} parent=1 // pred_check
      _
    $region27: #{tpu_custom_call.1} parent=1 // pred_check_branch
      %157 = sbr.rel (0) target = $region29
    $region28: #{tpu_custom_call.1} parent=1 // pred_region
      %159 = vsyncadd [#allocation4], 0
      %s160 = sshll.u32 [#allocation5], 4
      %s161 = int_to_ptr.vmem [resolvable:$true] %s160
      %s162 = sshll.u32 %s5, 4
      %s163 = int_to_ptr.hbm [resolvable:$true] %s162
      %168 = dma.vmem_to_hbm [thread:$0]  %s161, 256, %s163, [#allocation4], 128, 128, 8
    $region29: #{tpu_custom_call.1} parent=1 // pred_fallthru
      _
    // Predicated region
    $region30: #{tpu_custom_call.1} parent=1 // pred_check
      _
    $region31: #{tpu_custom_call.1} parent=1 // pred_check_branch
      %170 = sbr.rel (0) target = $region33
    $region32: #{tpu_custom_call.1} parent=1 // pred_region
      _
    $region33: #{tpu_custom_call.1} parent=1 // pred_fallthru
      _
    // Predicated region
    $region34: #{tpu_custom_call.1} parent=1 // pred_check
      _
    $region35: #{tpu_custom_call.1} parent=1 // pred_check_branch
      %172 = sbr.rel (0) target = $region37
    $region36: #{tpu_custom_call.1} parent=1 // pred_region
      _
    $region37: #{tpu_custom_call.1} parent=1 // pred_fallthru
      _
    // Predicated region
    $region38: #{tpu_custom_call.1} parent=1 // pred_check
      _
    $region39: #{tpu_custom_call.1} parent=1 // pred_check_branch
      %174 = sbr.rel (0) target = $region41
    $region40: #{tpu_custom_call.1} parent=1 // pred_region
      %176 = dma.done [#allocation4], 256
    $region41: #{tpu_custom_call.1} parent=1 // pred_fallthru
      _
    // Predicated region
    $region42: #{tpu_custom_call.1} parent=1 // pred_check
      _
    $region43: #{tpu_custom_call.1} parent=1 // pred_check_branch
      %178 = sbr.rel (0) target = $region45
    $region44: #{tpu_custom_call.1} parent=1 // pred_region
      _
    $region45: #{tpu_custom_call.1} parent=1 // pred_fallthru
      _
    // Predicated region
    $region46: #{tpu_custom_call.1} parent=1 // pred_check
      _
    $region47: #{tpu_custom_call.1} parent=1 // pred_check_branch
      %180 = sbr.rel (0) target = $region49
    $region48: #{tpu_custom_call.1} parent=1 // pred_region
      _
    $region49: #{tpu_custom_call.1} parent=1 // pred_fallthru
      _
    %181 = vsyncpa [#allocation3], 1
    %182 = vsyncpa [#allocation4], 1

</llo_original>
